<compile_context>
chip_gen: v6e
topology: v6e:2x2x1
jax: 0.10.0
libtpu: 0.0.40
codegen_flags: <defaults>
</compile_context>

<pallas_src>
import functools

import jax
import jax.numpy as jnp
from jax.experimental import pallas as pl
from jax.experimental.pallas import tpu as pltpu


def _round_up(n, m):
    return ((n + m - 1) // m) * m


def ae_kernel(x_ref, w1_ref, b1_ref, w2_ref, b2_ref, w3_ref, b3_ref, o_ref, *, act_dtype):
    # Batch-on-lanes: x_ref is (5, TB); all activations are (features, TB).
    x = x_ref[...].astype(act_dtype)                                  # cast in-kernel (free on EUP path)

    # Layer 1 (20, 5) @ (5, TB) on the MXU, f32 accumulate; bias (20, 1) broadcasts on lanes.
    h1 = jnp.dot(w1_ref[...], x, preferred_element_type=jnp.float32) + b1_ref[...]
    h1 = jnp.tanh(h1.astype(act_dtype))                               # EUP tanh in act_dtype

    # Layer 2 (20, 20) @ (20, TB) on the MXU with act_dtype operands, f32 accumulate.
    h2 = jnp.dot(w2_ref[...], h1, preferred_element_type=jnp.float32) + b2_ref[...]
    h2 = jnp.tanh(h2.astype(act_dtype))

    # Layer 3 (1, 20) @ (20, TB) on the MXU (no XLU sublane reduction).
    h3 = jnp.dot(w3_ref[...], h2, preferred_element_type=jnp.float32) + b3_ref[...]
    o_ref[...] = h3.astype(o_ref.dtype)                               # (1, TB), lane-dense store


def _device_config():
    """(activation dtype, minimum grid steps) chosen from the local TPU generation."""
    act_dtype, min_steps = jnp.float32, 1
    try:
        kind = jax.devices()[0].device_kind.lower()
        # v2-v5 have no bf16 VPU/EUP -> keep f32; v6e/v7x (and newer) get bf16 activations.
        if not any(t in kind for t in ("v2", "v3", "v4", "v5")):
            act_dtype = jnp.bfloat16
        # v7x has 2 TensorCores per chip -> need grid >= 2 for the "parallel" axis to split.
        if "v7" in kind or "tpu7" in kind:
            min_steps = 2
    except Exception:  # pragma: no cover - unknown backend, keep safe defaults
        pass
    return act_dtype, min_steps


def ae_forward(x, params, *, tb_cap=32768, act_dtype=None, min_grid_steps=None):
    """x: (B, 5) -> (B, 1). `tb_cap` caps the per-grid-step batch tile (lane axis)."""
    w1, b1, w2, b2, w3, b3 = params
    B = x.shape[0]

    auto_act, auto_min_steps = _device_config()
    if act_dtype is None:
        act_dtype = auto_act
    if min_grid_steps is None:
        min_grid_steps = auto_min_steps

    # --- Tile / grid selection: lane-dense (multiple of 128), minimal padding, and
    # --- at least `min_grid_steps` steps (v7x) when enough 128-lane tiles exist.
    tb_cap = max(128, (int(tb_cap) // 128) * 128)
    n_tiles = pl.cdiv(B, 128)                       # number of 128-lane column tiles
    steps = min(max(pl.cdiv(B, tb_cap), min_grid_steps), n_tiles)
    steps = max(steps, 1)
    tiles_per_step = pl.cdiv(n_tiles, steps)
    tb = tiles_per_step * 128
    grid_steps = pl.cdiv(n_tiles, tiles_per_step)
    b_pad = grid_steps * tb                         # pad is < tb + 128, never ~tb_cap

    # Batch on lanes: (B, 5) -> (5, b_pad). Single fused transpose+pad (no dtype pass);
    # skipped entirely when B already fills the padded slab.
    if b_pad == B:
        xt = x.T
    else:
        xt = jnp.zeros((5, b_pad), x.dtype).at[:, :B].set(x.T)

    # Weights in the activation dtype (tiny casts); biases stay f32 (added to f32 accumulators).
    w1c = w1.astype(act_dtype)                      # (20, 5)
    w2c = w2.astype(act_dtype)                      # (20, 20)
    w3c = w3.astype(act_dtype)                      # (1, 20)
    b1c = b1.reshape(20, 1).astype(jnp.float32)
    b2c = b2.reshape(20, 1).astype(jnp.float32)
    b3c = b3.reshape(1, 1).astype(jnp.float32)

    const = lambda a: pl.BlockSpec(a.shape, lambda i: (0,) * a.ndim)  # VMEM-resident params

    bytes_accessed = (
        int(xt.size) * xt.dtype.itemsize
        + b_pad * 4
        + sum(int(p.size) * int(p.dtype.itemsize) for p in (w1c, b1c, w2c, b2c, w3c, b3c))
    )
    cost = pl.CostEstimate(
        flops=2 * b_pad * (5 * 20 + 20 * 20 + 20),
        transcendentals=40 * b_pad,
        bytes_accessed=bytes_accessed,
    )

    out = pl.pallas_call(
        functools.partial(ae_kernel, act_dtype=act_dtype),
        out_shape=jax.ShapeDtypeStruct((1, b_pad), jnp.float32),
        grid=(grid_steps,),
        in_specs=[
            pl.BlockSpec((5, tb), lambda i: (0, i)),   # x tile: pipelined over batch
            const(w1c), const(b1c), const(w2c), const(b2c), const(w3c), const(b3c),
        ],
        out_specs=pl.BlockSpec((1, tb), lambda i: (0, i)),  # lane-dense output tile
        compiler_params=pltpu.CompilerParams(dimension_semantics=("parallel",)),
        cost_estimate=cost,
    )(xt, w1c, b1c, w2c, b2c, w3c, b3c)

    return out[:, :B].T                              # back to (B, 1)


def init_params(key):
    # PyTorch nn.Linear default init: U(-1/sqrt(fan_in), +1/sqrt(fan_in)); weights (out, in).
    def linear(k, fan_in, fan_out):
        kw, kb = jax.random.split(k)
        bound = 1.0 / jnp.sqrt(fan_in)
        w = jax.random.uniform(kw, (fan_out, fan_in), jnp.float32, -bound, bound)
        b = jax.random.uniform(kb, (fan_out,), jnp.float32, -bound, bound)
        return w, b

    k1, k2, k3 = jax.random.split(key, 3)
    w1, b1 = linear(k1, 5, 20)
    w2, b2 = linear(k2, 20, 20)
    w3, b3 = linear(k3, 20, 1)
    return (w1, b1, w2, b2, w3, b3)


def ae_reference(x, params):
    w1, b1, w2, b2, w3, b3 = params
    h = jnp.tanh(x @ w1.T + b1)
    h = jnp.tanh(h @ w2.T + b2)
    return h @ w3.T + b3


if __name__ == "__main__":
    key = jax.random.PRNGKey(0)
    kp, kx = jax.random.split(key)
    params = init_params(kp)

    batch = 8
    x = jax.random.normal(kx, (batch, 5), dtype=jnp.float32)
    ref = ae_reference(x, params)

    # Full-f32 path (exact on every TPU generation): tight tolerance.
    fwd_f32 = jax.jit(lambda xx: ae_forward(xx, params, act_dtype=jnp.float32))
    out = jax.block_until_ready(fwd_f32(x))
    assert out.shape == (batch, 1), out.shape
    assert jnp.allclose(out, ref, atol=1e-5, rtol=1e-5), (out, ref)

    # Auto-tuned path (bf16 activations on v6e/v7x, f32 on v5e): loose tolerance.
    fwd_auto = jax.jit(lambda xx: ae_forward(xx, params))
    out_auto = jax.block_until_ready(fwd_auto(x))
    assert out_auto.shape == (batch, 1), out_auto.shape
    assert jnp.allclose(out_auto, ref, atol=5e-2, rtol=5e-2), (out_auto, ref)

    print("KERNEL_OK")
</pallas_src>

<mosaic_0001>
module attributes {stable_mosaic.version = 11 : i64} {
  func.func @ae_kernel(%arg0: i32, %arg1: memref<5x128xf32, #tpu.memory_space<vmem>>, %arg2: memref<20x5xf32, #tpu.memory_space<vmem>>, %arg3: memref<20x1xf32, #tpu.memory_space<vmem>>, %arg4: memref<20x20xf32, #tpu.memory_space<vmem>>, %arg5: memref<20x1xf32, #tpu.memory_space<vmem>>, %arg6: memref<1x20xf32, #tpu.memory_space<vmem>>, %arg7: memref<1x1xf32, #tpu.memory_space<vmem>>, %arg8: memref<1x128xf32, #tpu.memory_space<vmem>>) attributes {dimension_semantics = [#tpu.dimension_semantics<parallel>], iteration_bounds = array<i64: 1>, scalar_prefetch = 0 : i64, scratch_operands = 0 : i64, tpu.core_type = #tpu.core_type<tc>, window_params = [{transform_indices = @transform_0, window_bounds = array<i64: 5, 128>}, {pipeline_mode = #tpu.pipeline_mode<synchronous>, transform_indices = @transform_1, window_bounds = array<i64: 20, 5>}, {pipeline_mode = #tpu.pipeline_mode<synchronous>, transform_indices = @transform_2, window_bounds = array<i64: 20, 1>}, {pipeline_mode = #tpu.pipeline_mode<synchronous>, transform_indices = @transform_3, window_bounds = array<i64: 20, 20>}, {pipeline_mode = #tpu.pipeline_mode<synchronous>, transform_indices = @transform_4, window_bounds = array<i64: 20, 1>}, {pipeline_mode = #tpu.pipeline_mode<synchronous>, transform_indices = @transform_5, window_bounds = array<i64: 1, 20>}, {pipeline_mode = #tpu.pipeline_mode<synchronous>, transform_indices = @transform_6, window_bounds = array<i64: 1, 1>}, {transform_indices = @transform_7, window_bounds = array<i64: 1, 128>}]} {
    %c0 = arith.constant 0 : index
    %c0_0 = arith.constant 0 : index
    %0 = vector.load %arg1[%c0, %c0_0] : memref<5x128xf32, #tpu.memory_space<vmem>>, vector<5x128xf32>
    %c0_1 = arith.constant 0 : index
    %c0_2 = arith.constant 0 : index
    %1 = vector.load %arg2[%c0_1, %c0_2] : memref<20x5xf32, #tpu.memory_space<vmem>>, vector<20x5xf32>
    %cst = arith.constant dense<0.000000e+00> : vector<20x128xf32>
    %2 = tpu.matmul %1, %0, %cst {dimension_numbers = #tpu.dot_dimension_numbers<[1], [0], [0], [1], [0, 0, 1, 1], [], []>} : vector<20x5xf32>, vector<5x128xf32>, vector<20x128xf32> -> vector<20x128xf32>
    %c0_3 = arith.constant 0 : index
    %c0_4 = arith.constant 0 : index
    %3 = vector.load %arg3[%c0_3, %c0_4] : memref<20x1xf32, #tpu.memory_space<vmem>>, vector<20x1xf32>
    %4 = vector.broadcast %3 : vector<20x1xf32> to vector<20x128xf32>
    %5 = arith.addf %2, %4 : vector<20x128xf32>
    %6 = math.tanh %5 : vector<20x128xf32>
    %c0_5 = arith.constant 0 : index
    %c0_6 = arith.constant 0 : index
    %7 = vector.load %arg4[%c0_5, %c0_6] : memref<20x20xf32, #tpu.memory_space<vmem>>, vector<20x20xf32>
    %cst_7 = arith.constant dense<0.000000e+00> : vector<20x128xf32>
    %8 = tpu.matmul %7, %6, %cst_7 {dimension_numbers = #tpu.dot_dimension_numbers<[1], [0], [0], [1], [0, 0, 1, 1], [], []>} : vector<20x20xf32>, vector<20x128xf32>, vector<20x128xf32> -> vector<20x128xf32>
    %c0_8 = arith.constant 0 : index
    %c0_9 = arith.constant 0 : index
    %9 = vector.load %arg5[%c0_8, %c0_9] : memref<20x1xf32, #tpu.memory_space<vmem>>, vector<20x1xf32>
    %10 = vector.broadcast %9 : vector<20x1xf32> to vector<20x128xf32>
    %11 = arith.addf %8, %10 : vector<20x128xf32>
    %12 = math.tanh %11 : vector<20x128xf32>
    %c0_10 = arith.constant 0 : index
    %c0_11 = arith.constant 0 : index
    %13 = vector.load %arg6[%c0_10, %c0_11] : memref<1x20xf32, #tpu.memory_space<vmem>>, vector<1x20xf32>
    %cst_12 = arith.constant dense<0.000000e+00> : vector<1x128xf32>
    %14 = tpu.matmul %13, %12, %cst_12 {dimension_numbers = #tpu.dot_dimension_numbers<[1], [0], [0], [1], [0, 0, 1, 1], [], []>} : vector<1x20xf32>, vector<20x128xf32>, vector<1x128xf32> -> vector<1x128xf32>
    %c0_13 = arith.constant 0 : index
    %c0_14 = arith.constant 0 : index
    %15 = vector.load %arg7[%c0_13, %c0_14] : memref<1x1xf32, #tpu.memory_space<vmem>>, vector<1x1xf32>
    %16 = vector.broadcast %15 : vector<1x1xf32> to vector<1x128xf32>
    %17 = arith.addf %14, %16 : vector<1x128xf32>
    %c0_15 = arith.constant 0 : index
    %c0_16 = arith.constant 0 : index
    %18 = vector.load %arg8[%c0_15, %c0_16] : memref<1x128xf32, #tpu.memory_space<vmem>>, vector<1x128xf32>
    tpu.vector_store %arg8[%c0_15, %c0_16], %17 {strides = array<i32>} : memref<1x128xf32, #tpu.memory_space<vmem>>, vector<1x128xf32>,
    return
  }
  func.func @transform_0(%arg0: i32) -> (i32, i32) {
    %c0_i32 = arith.constant 0 : i32
    %c0_i32_0 = arith.constant 0 : i32
    return %c0_i32, %arg0 : i32, i32
  }
  func.func @transform_1(%arg0: i32) -> (i32, i32) {
    %c0_i32 = arith.constant 0 : i32
    %c0_i32_0 = arith.constant 0 : i32
    %c0_i32_1 = arith.constant 0 : i32
    return %c0_i32, %c0_i32_0 : i32, i32
  }
  func.func @transform_2(%arg0: i32) -> (i32, i32) {
    %c0_i32 = arith.constant 0 : i32
    %c0_i32_0 = arith.constant 0 : i32
    %c0_i32_1 = arith.constant 0 : i32
    return %c0_i32, %c0_i32_0 : i32, i32
  }
  func.func @transform_3(%arg0: i32) -> (i32, i32) {
    %c0_i32 = arith.constant 0 : i32
    %c0_i32_0 = arith.constant 0 : i32
    %c0_i32_1 = arith.constant 0 : i32
    return %c0_i32, %c0_i32_0 : i32, i32
  }
  func.func @transform_4(%arg0: i32) -> (i32, i32) {
    %c0_i32 = arith.constant 0 : i32
    %c0_i32_0 = arith.constant 0 : i32
    %c0_i32_1 = arith.constant 0 : i32
    return %c0_i32, %c0_i32_0 : i32, i32
  }
  func.func @transform_5(%arg0: i32) -> (i32, i32) {
    %c0_i32 = arith.constant 0 : i32
    %c0_i32_0 = arith.constant 0 : i32
    %c0_i32_1 = arith.constant 0 : i32
    return %c0_i32, %c0_i32_0 : i32, i32
  }
  func.func @transform_6(%arg0: i32) -> (i32, i32) {
    %c0_i32 = arith.constant 0 : i32
    %c0_i32_0 = arith.constant 0 : i32
    %c0_i32_1 = arith.constant 0 : i32
    return %c0_i32, %c0_i32_0 : i32, i32
  }
  func.func @transform_7(%arg0: i32) -> (i32, i32) {
    %c0_i32 = arith.constant 0 : i32
    %c0_i32_0 = arith.constant 0 : i32
    return %c0_i32, %arg0 : i32, i32
  }
}

</mosaic_0001>

<llo_original>
// kernel: _lambda_.1
$region0: #{_lambda_.1}
  #allocation0 [shape = 'u32[]', space=smem, size = 0x4, offset = 0x4, fixed_abs, tag = 'smem constant byte address 0x4 - core index']
  #allocation1 [shape = 'u32[144,128]{1,0:T(1,128)}', space=vmem, size = 0x12000, scoped, tag = 'internal scratch']
  #allocation2 [shape = 'f32[1,1]{1,0:T(1,128)S(1)}', space=vmem, size = 0x200, scoped, tag = 'scoped memory for _lambda_.1']
  %s0 = inlined_call_operand.vmem [shape: f32[5,128], index: 0, kind: input, shape index: {}]
  %s1 = inlined_call_operand.vmem [shape: f32[20,5], index: 1, kind: input, shape index: {}]
  %s2 = inlined_call_operand.hbm [shape: f32[20,1], index: 2, kind: input, shape index: {}]
  %s3 = inlined_call_operand.vmem [shape: f32[20,20], index: 3, kind: input, shape index: {}]
  %s4 = inlined_call_operand.hbm [shape: f32[20,1], index: 4, kind: input, shape index: {}]
  %s5 = inlined_call_operand.vmem [shape: f32[1,20], index: 5, kind: input, shape index: {}]
  %s6 = inlined_call_operand.<no memory space> [shape: f32[1,1], index: 6, kind: input, shape index: {}]
  %s7 = inlined_call_operand.vmem [shape: f32[1,128], index: 7, kind: output, shape index: {}]
  %s8 = sld [smem:[#allocation0]]
  $region46: #{_lambda_.1} parent=0
    _
  %s10 = ssub.s32 1, %s8
  %s11 = scalar_select 0, %s10, %s8
  %v12 = vstv %s6
  %13 = vst [vmem:[#allocation2] sm:$0x1] %v12
  $region1: #{_lambda_.1} parent=0
    #allocation3 [shape = 'u8[12288]{0}', space=vmem, size = 0x3000, scoped, tag = 'input window, operand 2, single buffered']
    #allocation4 [shape = 's32[1]{0}', space=sflag, size = 0x4, scoped, tag = 'scoped memory for _lambda_.1']
    #allocation5 [shape = 'u8[12288]{0}', space=vmem, size = 0x3000, scoped, tag = 'input window, operand 4, single buffered']
    #allocation6 [shape = 's32[1]{0}', space=sflag, size = 0x4, scoped, tag = 'scoped memory for _lambda_.1']
    %14 = vsyncpa [#allocation4], 0
    %15 = vsyncpa [#allocation6], 0
    // Predicated region
    $region2: #{_lambda_.1} parent=1 // pred_check
      _
    $region3: #{_lambda_.1} parent=1 // pred_check_branch
      %17 = sbr.rel (0) target = $region5
    $region4: #{_lambda_.1} parent=1 // pred_region
      _
    $region5: #{_lambda_.1} parent=1 // pred_fallthru
      _
    // Predicated region
    $region6: #{_lambda_.1} parent=1 // pred_check
      _
    $region7: #{_lambda_.1} parent=1 // pred_check_branch
      %19 = sbr.rel (0) target = $region9
    $region8: #{_lambda_.1} parent=1 // pred_region
      _
    $region9: #{_lambda_.1} parent=1 // pred_fallthru
      _
    // Predicated region
    $region10: #{_lambda_.1} parent=1 // pred_check
      _
    $region11: #{_lambda_.1} parent=1 // pred_check_branch
      %21 = sbr.rel (0) target = $region13
    $region12: #{_lambda_.1} parent=1 // pred_region
      %s23 = ssub.s32 384, 384
      %24 = vsyncadd [#allocation4], %s23
      %s25 = sshll.u32 [#allocation3], 4
      %s26 = int_to_ptr.vmem [resolvable:$true] %s25
      %31 = dma.hbm_to_vmem [thread:$0]  %s2, 384, %s26, [#allocation4], 128, 128, 8
    $region13: #{_lambda_.1} parent=1 // pred_fallthru
      _
    // Predicated region
    $region14: #{_lambda_.1} parent=1 // pred_check
      _
    $region15: #{_lambda_.1} parent=1 // pred_check_branch
      %33 = sbr.rel (0) target = $region17
    $region16: #{_lambda_.1} parent=1 // pred_region
      _
    $region17: #{_lambda_.1} parent=1 // pred_fallthru
      _
    // Predicated region
    $region18: #{_lambda_.1} parent=1 // pred_check
      _
    $region19: #{_lambda_.1} parent=1 // pred_check_branch
      %35 = sbr.rel (0) target = $region21
    $region20: #{_lambda_.1} parent=1 // pred_region
      %s37 = ssub.s32 384, 384
      %38 = vsyncadd [#allocation6], %s37
      %s39 = sshll.u32 [#allocation5], 4
      %s40 = int_to_ptr.vmem [resolvable:$true] %s39
      %45 = dma.hbm_to_vmem [thread:$0]  %s4, 384, %s40, [#allocation6], 128, 128, 8
    $region21: #{_lambda_.1} parent=1 // pred_fallthru
      _
    // Predicated region
    $region22: #{_lambda_.1} parent=1 // pred_check
      _
    $region23: #{_lambda_.1} parent=1 // pred_check_branch
      %47 = sbr.rel (0) target = $region25
    $region24: #{_lambda_.1} parent=1 // pred_region
      _
    $region25: #{_lambda_.1} parent=1 // pred_fallthru
      _
    // Predicated region
    $region26: #{_lambda_.1} parent=1 // pred_check
      _
    $region27: #{_lambda_.1} parent=1 // pred_check_branch
      %49 = sbr.rel (0) target = $region29
    $region28: #{_lambda_.1} parent=1 // pred_region
      _
    $region29: #{_lambda_.1} parent=1 // pred_fallthru
      _
    // Predicated region
    $region30: #{_lambda_.1} parent=1 // pred_check
      _
    $region31: #{_lambda_.1} parent=1 // pred_check_branch
      %51 = sbr.rel (0) target = $region33
    $region32: #{_lambda_.1} parent=1 // pred_region
      %52 = dma.done [#allocation4], 384
    $region33: #{_lambda_.1} parent=1 // pred_fallthru
      _
    // Predicated region
    $region34: #{_lambda_.1} parent=1 // pred_check
      _
    $region35: #{_lambda_.1} parent=1 // pred_check_branch
      %54 = sbr.rel (0) target = $region37
    $region36: #{_lambda_.1} parent=1 // pred_region
      %55 = dma.done [#allocation6], 384
    $region37: #{_lambda_.1} parent=1 // pred_fallthru
      _
    %v56 = vld [vmem:[%s0] sm:$0x1f]
    %v57 = vld [vmem:[%s1] sm:$0xff]
    %v58 = vld [vmem:[%s1 + $0x8] sm:$0xff]
    %v59 = vld [vmem:[%s1 + $0x10] sm:$0xf]
    %v60 = vld [vmem:[#allocation3] sm:$0xff]
    %v61 = vld [vmem:[#allocation3 + $0x8] sm:$0xff]
    %v62 = vld [vmem:[#allocation3 + $0x10] sm:$0xf]
    %64 = vset.pattern.permute.xlu0 0
    %65 = vperm.xlu0 %64, %v60
    %v66 = vpop.permute.xlu0 %65
    %69 = vset.pattern.permute.xlu0 0
    %70 = vperm.xlu0 %69, %v61
    %v71 = vpop.permute.xlu0 %70
    %74 = vset.pattern.permute.xlu0 0
    %75 = vperm.xlu0 %74, %v62
    %v76 = vpop.permute.xlu0 %75
    %vm78 = vcmask 39936
    %v80 = vsel %vm78, %v57, 0
    %v83 = vsel %vm78, %v58, 0
    %v86 = vsel %vm78, %v59, 0
    %vm88 = vcmask 1044480
    %v90 = vsel %vm88, %v56, 0
    %92 = vmatprep.subr.mxu0 0.0
    %93 = vmatpush1.msra.mxu0 0.0
    %94 = vmatprep.subr.mxu0 0.0
    %95 = vmatpush1.msra.mxu0 0.0
    %96 = vmatprep.subr.mxu0 0.0
    %97 = vmatpush1.msra.mxu0 0.0
    %98 = vmatprep.subr.mxu0 0.0
    %99 = vmatpush1.msra.mxu0 0.0
    %100 = vmatprep.subr.mxu0 0.0
    %101 = vmatpush1.msra.mxu0 0.0
    %102 = vmatprep.subr.mxu0 0.0
    %103 = vmatpush1.msra.mxu0 0.0
    %104 = vmatprep.subr.mxu0 0.0
    %105 = vmatpush1.msra.mxu0 0.0
    %106 = vmatprep.subr.mxu0 0.0
    %107 = vmatpush1.msra.mxu0 0.0
    %108 = vmatprep.subr.mxu0 0.0
    %109 = vmatpush1.msra.mxu0 0.0
    %110 = vmatprep.subr.mxu0 0.0
    %111 = vmatpush1.msra.mxu0 0.0
    %112 = vmatprep.subr.mxu0 0.0
    %113 = vmatpush1.msra.mxu0 0.0
    %114 = vmatprep.subr.mxu0 0.0
    %115 = vmatpush1.msra.mxu0 0.0
    %116 = vmatprep.subr.mxu0 0.0
    %117 = vmatpush1.msra.mxu0 0.0
    %118 = vmatprep.subr.mxu0 0.0
    %119 = vmatpush1.msra.mxu0 0.0
    %120 = vmatprep.subr.mxu0 0.0
    %121 = vmatpush1.msra.mxu0 0.0
    %122 = vmatprep.subr.mxu0 0.0
    %123 = vmatpush1.msra.mxu0 %v90
    %124 = vmatprep.subr.mxu0 0.0
    %125 = vmatpush2.msra.mxu0 0.0
    %126 = vmatprep.subr.mxu0 0.0
    %127 = vmatpush2.msra.mxu0 0.0
    %128 = vmatprep.subr.mxu0 0.0
    %129 = vmatpush2.msra.mxu0 0.0
    %130 = vmatprep.subr.mxu0 0.0
    %131 = vmatpush2.msra.mxu0 0.0
    %132 = vmatprep.subr.mxu0 0.0
    %133 = vmatpush2.msra.mxu0 0.0
    %134 = vmatprep.subr.mxu0 0.0
    %135 = vmatpush2.msra.mxu0 0.0
    %136 = vmatprep.subr.mxu0 0.0
    %137 = vmatpush2.msra.mxu0 0.0
    %138 = vmatprep.subr.mxu0 0.0
    %139 = vmatpush2.msra.mxu0 0.0
    %140 = vmatprep.subr.mxu0 0.0
    %141 = vmatpush2.msra.mxu0 0.0
    %142 = vmatprep.subr.mxu0 0.0
    %143 = vmatpush2.msra.mxu0 0.0
    %144 = vmatprep.subr.mxu0 0.0
    %145 = vmatpush2.msra.mxu0 0.0
    %146 = vmatprep.subr.mxu0 0.0
    %147 = vmatpush2.msra.mxu0 0.0
    %148 = vmatprep.subr.mxu0 0.0
    %149 = vmatpush2.msra.mxu0 0.0
    %150 = vmatprep.subr.mxu0 0.0
    %151 = vmatpush2.msra.mxu0 0.0
    %152 = vmatprep.subr.mxu0 0.0
    %153 = vmatpush2.msra.mxu0 0.0
    %154 = vmatprep.subr.mxu0 0.0
    %155 = vmatpush2.msra.mxu0 0.0
    %156 = vmatprep.mubr.f32.mxu0 0.0
    %157 = vmatmul.mubr.f32.gmra.mxu0 %v80
    %v158 = vpop.f32.mrf.mxu0
    %v159 = vadd.f32 %v66, %v158
    %v160 = vpop.f32.mrf.mxu0
    %161 = vmatprep.mubr.f32.mxu0 0.0
    %162 = vmatmul.mubr.f32.gmra.mxu0 %v83
    %v163 = vpop.f32.mrf.mxu0
    %v164 = vadd.f32 %v71, %v163
    %v165 = vpop.f32.mrf.mxu0
    %166 = vmatprep.mubr.f32.mxu0 0.0
    %167 = vmatmul.mubr.f32.gmra.mxu0 %v86
    %v168 = vpop.f32.mrf.mxu0
    %v169 = vadd.f32 %v76, %v168
    %v170 = vpop.f32.mrf.mxu0
    %171 = vdwg.mxu0
    %v172 = vtanh.pop %v159
    %v173 = vtanh.pop %v164
    %v174 = vtanh.pop %v169
    %v175 = vld [vmem:[%s3] sm:$0xff]
    %v176 = vld [vmem:[%s3 + $0x8] sm:$0xff]
    %v177 = vld [vmem:[%s3 + $0x10] sm:$0xf]
    %v178 = vld [vmem:[#allocation5] sm:$0xff]
    %v179 = vld [vmem:[#allocation5 + $0x8] sm:$0xff]
    %v180 = vld [vmem:[#allocation5 + $0x10] sm:$0xf]
    %182 = vset.pattern.permute.xlu0 0
    %183 = vperm.xlu0 %182, %v178
    %v184 = vpop.permute.xlu0 %183
    %187 = vset.pattern.permute.xlu0 0
    %188 = vperm.xlu0 %187, %v179
    %v189 = vpop.permute.xlu0 %188
    %192 = vset.pattern.permute.xlu0 0
    %193 = vperm.xlu0 %192, %v180
    %v194 = vpop.permute.xlu0 %193
    %vm196 = vcmask 162816
    %v198 = vsel %vm196, %v175, 0
    %v201 = vsel %vm196, %v176, 0
    %v204 = vsel %vm196, %v177, 0
    %vm206 = vcmask 1043456
    %v208 = vsel %vm206, %v174, 0
    %210 = vmatprep.subr.mxu0 0.0
    %211 = vmatpush1.msra.mxu0 0.0
    %212 = vmatprep.subr.mxu0 0.0
    %213 = vmatpush1.msra.mxu0 0.0
    %214 = vmatprep.subr.mxu0 0.0
    %215 = vmatpush1.msra.mxu0 0.0
    %216 = vmatprep.subr.mxu0 0.0
    %217 = vmatpush1.msra.mxu0 0.0
    %218 = vmatprep.subr.mxu0 0.0
    %219 = vmatpush1.msra.mxu0 0.0
    %220 = vmatprep.subr.mxu0 0.0
    %221 = vmatpush1.msra.mxu0 0.0
    %222 = vmatprep.subr.mxu0 0.0
    %223 = vmatpush1.msra.mxu0 0.0
    %224 = vmatprep.subr.mxu0 0.0
    %225 = vmatpush1.msra.mxu0 0.0
    %226 = vmatprep.subr.mxu0 0.0
    %227 = vmatpush1.msra.mxu0 0.0
    %228 = vmatprep.subr.mxu0 0.0
    %229 = vmatpush1.msra.mxu0 0.0
    %230 = vmatprep.subr.mxu0 0.0
    %231 = vmatpush1.msra.mxu0 0.0
    %232 = vmatprep.subr.mxu0 0.0
    %233 = vmatpush1.msra.mxu0 0.0
    %234 = vmatprep.subr.mxu0 0.0
    %235 = vmatpush1.msra.mxu0 0.0
    %236 = vmatprep.subr.mxu0 0.0
    %237 = vmatpush1.msra.mxu0 %v208
    %238 = vmatprep.subr.mxu0 0.0
    %239 = vmatpush1.msra.mxu0 %v173
    %240 = vmatprep.subr.mxu0 0.0
    %241 = vmatpush1.msra.mxu0 %v172
    %242 = vmatprep.subr.mxu0 0.0
    %243 = vmatpush2.msra.mxu0 0.0
    %244 = vmatprep.subr.mxu0 0.0
    %245 = vmatpush2.msra.mxu0 0.0
    %246 = vmatprep.subr.mxu0 0.0
    %247 = vmatpush2.msra.mxu0 0.0
    %248 = vmatprep.subr.mxu0 0.0
    %249 = vmatpush2.msra.mxu0 0.0
    %250 = vmatprep.subr.mxu0 0.0
    %251 = vmatpush2.msra.mxu0 0.0
    %252 = vmatprep.subr.mxu0 0.0
    %253 = vmatpush2.msra.mxu0 0.0
    %254 = vmatprep.subr.mxu0 0.0
    %255 = vmatpush2.msra.mxu0 0.0
    %256 = vmatprep.subr.mxu0 0.0
    %257 = vmatpush2.msra.mxu0 0.0
    %258 = vmatprep.subr.mxu0 0.0
    %259 = vmatpush2.msra.mxu0 0.0
    %260 = vmatprep.subr.mxu0 0.0
    %261 = vmatpush2.msra.mxu0 0.0
    %262 = vmatprep.subr.mxu0 0.0
    %263 = vmatpush2.msra.mxu0 0.0
    %264 = vmatprep.subr.mxu0 0.0
    %265 = vmatpush2.msra.mxu0 0.0
    %266 = vmatprep.subr.mxu0 0.0
    %267 = vmatpush2.msra.mxu0 0.0
    %268 = vmatprep.subr.mxu0 0.0
    %269 = vmatpush2.msra.mxu0 0.0
    %270 = vmatprep.subr.mxu0 0.0
    %271 = vmatpush2.msra.mxu0 0.0
    %272 = vmatprep.subr.mxu0 0.0
    %273 = vmatpush2.msra.mxu0 0.0
    %274 = vmatprep.mubr.f32.mxu0 0.0
    %275 = vmatmul.mubr.f32.gmra.mxu0 %v198
    %v276 = vpop.f32.mrf.mxu0
    %v277 = vadd.f32 %v184, %v276
    %v278 = vpop.f32.mrf.mxu0
    %279 = vmatprep.mubr.f32.mxu0 0.0
    %280 = vmatmul.mubr.f32.gmra.mxu0 %v201
    %v281 = vpop.f32.mrf.mxu0
    %v282 = vadd.f32 %v189, %v281
    %v283 = vpop.f32.mrf.mxu0
    %284 = vmatprep.mubr.f32.mxu0 0.0
    %285 = vmatmul.mubr.f32.gmra.mxu0 %v204
    %v286 = vpop.f32.mrf.mxu0
    %v287 = vadd.f32 %v194, %v286
    %v288 = vpop.f32.mrf.mxu0
    %289 = vdwg.mxu0
    %v290 = vtanh.pop %v277
    %v291 = vtanh.pop %v282
    %v292 = vtanh.pop %v287
    %v293 = vld [vmem:[%s5] sm:$0x1]
    %v294 = vld [vmem:[#allocation2] sm:$0x1]
    %296 = vset.pattern.permute.xlu0 0
    %297 = vperm.xlu0 %296, %v294
    %v298 = vpop.permute.xlu0 %297
    %v300 = vlaneseq
    %v301 = vshrl.u32 %v300, 7
    %v302 = vsub.s32 0, %v301
    %v303 = vrot.slane %v298, %v302
    %v305 = vsel %vm196, %v293, 0
    %v308 = vsel %vm206, %v292, 0
    %310 = vmatprep.subr.mxu0 0.0
    %311 = vmatpush1.msra.mxu0 0.0
    %312 = vmatprep.subr.mxu0 0.0
    %313 = vmatpush1.msra.mxu0 0.0
    %314 = vmatprep.subr.mxu0 0.0
    %315 = vmatpush1.msra.mxu0 0.0
    %316 = vmatprep.subr.mxu0 0.0
    %317 = vmatpush1.msra.mxu0 0.0
    %318 = vmatprep.subr.mxu0 0.0
    %319 = vmatpush1.msra.mxu0 0.0
    %320 = vmatprep.subr.mxu0 0.0
    %321 = vmatpush1.msra.mxu0 0.0
    %322 = vmatprep.subr.mxu0 0.0
    %323 = vmatpush1.msra.mxu0 0.0
    %324 = vmatprep.subr.mxu0 0.0
    %325 = vmatpush1.msra.mxu0 0.0
    %326 = vmatprep.subr.mxu0 0.0
    %327 = vmatpush1.msra.mxu0 0.0
    %328 = vmatprep.subr.mxu0 0.0
    %329 = vmatpush1.msra.mxu0 0.0
    %330 = vmatprep.subr.mxu0 0.0
    %331 = vmatpush1.msra.mxu0 0.0
    %332 = vmatprep.subr.mxu0 0.0
    %333 = vmatpush1.msra.mxu0 0.0
    %334 = vmatprep.subr.mxu0 0.0
    %335 = vmatpush1.msra.mxu0 0.0
    %336 = vmatprep.subr.mxu0 0.0
    %337 = vmatpush1.msra.mxu0 %v308
    %338 = vmatprep.subr.mxu0 0.0
    %339 = vmatpush1.msra.mxu0 %v291
    %340 = vmatprep.subr.mxu0 0.0
    %341 = vmatpush1.msra.mxu0 %v290
    %342 = vmatprep.subr.mxu0 0.0
    %343 = vmatpush2.msra.mxu0 0.0
    %344 = vmatprep.subr.mxu0 0.0
    %345 = vmatpush2.msra.mxu0 0.0
    %346 = vmatprep.subr.mxu0 0.0
    %347 = vmatpush2.msra.mxu0 0.0
    %348 = vmatprep.subr.mxu0 0.0
    %349 = vmatpush2.msra.mxu0 0.0
    %350 = vmatprep.subr.mxu0 0.0
    %351 = vmatpush2.msra.mxu0 0.0
    %352 = vmatprep.subr.mxu0 0.0
    %353 = vmatpush2.msra.mxu0 0.0
    %354 = vmatprep.subr.mxu0 0.0
    %355 = vmatpush2.msra.mxu0 0.0
    %356 = vmatprep.subr.mxu0 0.0
    %357 = vmatpush2.msra.mxu0 0.0
    %358 = vmatprep.subr.mxu0 0.0
    %359 = vmatpush2.msra.mxu0 0.0
    %360 = vmatprep.subr.mxu0 0.0
    %361 = vmatpush2.msra.mxu0 0.0
    %362 = vmatprep.subr.mxu0 0.0
    %363 = vmatpush2.msra.mxu0 0.0
    %364 = vmatprep.subr.mxu0 0.0
    %365 = vmatpush2.msra.mxu0 0.0
    %366 = vmatprep.subr.mxu0 0.0
    %367 = vmatpush2.msra.mxu0 0.0
    %368 = vmatprep.subr.mxu0 0.0
    %369 = vmatpush2.msra.mxu0 0.0
    %370 = vmatprep.subr.mxu0 0.0
    %371 = vmatpush2.msra.mxu0 0.0
    %372 = vmatprep.subr.mxu0 0.0
    %373 = vmatpush2.msra.mxu0 0.0
    %374 = vmatprep.mubr.f32.mxu0 0.0
    %375 = vmatmul.mubr.f32.gmra.mxu0 %v305
    %v376 = vpop.f32.mrf.mxu0
    %v377 = vadd.f32 %v303, %v376
    %v378 = vpop.f32.mrf.mxu0
    %379 = vdwg.mxu0
    %380 = vst [vmem:[%s7] sm:$0x1] %v377
    // Predicated region
    $region38: #{_lambda_.1} parent=1 // pred_check
      _
    $region39: #{_lambda_.1} parent=1 // pred_check_branch
      %382 = sbr.rel (0) target = $region41
    $region40: #{_lambda_.1} parent=1 // pred_region
      _
    $region41: #{_lambda_.1} parent=1 // pred_fallthru
      _
    // Predicated region
    $region42: #{_lambda_.1} parent=1 // pred_check
      _
    $region43: #{_lambda_.1} parent=1 // pred_check_branch
      %384 = sbr.rel (0) target = $region45
    $region44: #{_lambda_.1} parent=1 // pred_region
      _
    $region45: #{_lambda_.1} parent=1 // pred_fallthru
      _
    %385 = vsyncpa [#allocation4], 1
    %386 = vsyncpa [#allocation6], 1

</llo_original>
